<compile_context>
chip_gen: v6e
topology: v6e:2x2x1
jax: 0.10.0
libtpu: 0.0.40
codegen_flags: <defaults>
</compile_context>

<pallas_src>
import jax
import jax.numpy as jnp
from jax.experimental import pallas as pl
from jax.experimental.pallas import tpu as pltpu


def _identity_augmentation_kernel(x_ref, o_ref):
    # Elementwise pass-through on the VPU: out = in.
    o_ref[...] = x_ref[...]


def _pick_lane(total: int):
    """Largest lane width (multiple of 128) that exactly divides `total`."""
    for lane in (512, 256, 128):
        if total % lane == 0:
            return lane
    return None


def augmentation_forward(x: jax.Array) -> jax.Array:
    """Identity augmentation forward pass (same shape/dtype out)."""
    orig_shape = x.shape
    dtype = x.dtype
    itemsize = jnp.dtype(dtype).itemsize
    total = x.size
    if total == 0:
        return x

    # ---- lane-dense 2D view (no HBM copy on the common path) ---------------
    lane = _pick_lane(total)
    if lane is None:
        # Rare misaligned fallback: pad the tail (costs one extra HBM pass).
        # TODO(synk): could instead run the kernel on the aligned prefix and
        #             stitch the tiny tail, but typical NCHW image batches
        #             never hit this branch.
        lane = 512
        rows = -(-total // lane)
        flat = jnp.pad(x.reshape(-1), (0, rows * lane - total))
        x2d = flat.reshape(rows, lane)
        needs_slice = True
    else:
        x2d = x.reshape(total // lane, lane)   # pure reshape of contiguous data
        needs_slice = False

    rows = x2d.shape[0]

    # ---- block sizing: ~4 MiB (f32) per block, multiple of 8 sublanes ------
    MAX_BLOCK_ELEMS = 1 << 20                  # 1M elems = 4 MiB f32 / 2 MiB bf16
    tr_cap = max(8, (MAX_BLOCK_ELEMS // lane) // 8 * 8)
    if rows <= tr_cap:
        tr = rows                              # tiny inputs: single full block
        grid = (1,)
    else:
        tr = tr_cap
        grid = (pl.cdiv(rows, tr),)            # partial trailing block is fine

    tile_bytes = tr * lane * itemsize
    # 2 buffers each for input and output (double-buffering) plus headroom,
    # capped below v7x's 64 MiB per-TC VMEM, above v5e's 16 MiB scoped default.
    vmem_limit = min(48 * 1024 * 1024, max(32 * 1024 * 1024, 5 * tile_bytes))

    out2d = pl.pallas_call(
        _identity_augmentation_kernel,
        out_shape=jax.ShapeDtypeStruct(x2d.shape, x2d.dtype),
        grid=grid,
        in_specs=[pl.BlockSpec((tr, lane), lambda i: (i, 0))],
        out_specs=pl.BlockSpec((tr, lane), lambda i: (i, 0)),
        compiler_params=pltpu.CompilerParams(
            dimension_semantics=("parallel",),   # shard tiles across TCs on v7x
            vmem_limit_bytes=vmem_limit,
        ),
        cost_estimate=pl.CostEstimate(
            flops=0,
            transcendentals=0,
            bytes_accessed=2 * rows * lane * itemsize,
        ),
    )(x2d)

    if needs_slice:
        return out2d.reshape(-1)[:total].reshape(orig_shape)
    return out2d.reshape(orig_shape)


if __name__ == "__main__":
    key = jax.random.PRNGKey(0)
    # Small image batch consistent with the module's Union[Image, Tensor] input (NCHW).
    x = jax.random.normal(key, (2, 4, 16, 16), dtype=jnp.float32)

    y = augmentation_forward(x)
    y = jax.block_until_ready(y)

    assert y.shape == x.shape
    assert y.dtype == x.dtype
    assert bool(jnp.array_equal(y, x))

    print("KERNEL_OK")
</pallas_src>

<mosaic_0001>
module attributes {stable_mosaic.version = 11 : i64} {
  func.func @_identity_augmentation_kernel(%arg0: i32, %arg1: memref<4x512xf32, #tpu.memory_space<vmem>>, %arg2: memref<4x512xf32, #tpu.memory_space<vmem>>) attributes {dimension_semantics = [#tpu.dimension_semantics<parallel>], iteration_bounds = array<i64: 1>, scalar_prefetch = 0 : i64, scratch_operands = 0 : i64, tpu.core_type = #tpu.core_type<tc>, window_params = [{transform_indices = @transform_0, window_bounds = array<i64: 4, 512>}, {transform_indices = @transform_1, window_bounds = array<i64: 4, 512>}]} {
    %c0 = arith.constant 0 : index
    %c0_0 = arith.constant 0 : index
    %0 = vector.load %arg1[%c0, %c0_0] : memref<4x512xf32, #tpu.memory_space<vmem>>, vector<4x512xf32>
    %c0_1 = arith.constant 0 : index
    %c0_2 = arith.constant 0 : index
    %1 = vector.load %arg2[%c0_1, %c0_2] : memref<4x512xf32, #tpu.memory_space<vmem>>, vector<4x512xf32>
    tpu.vector_store %arg2[%c0_1, %c0_2], %0 {strides = array<i32>} : memref<4x512xf32, #tpu.memory_space<vmem>>, vector<4x512xf32>,
    return
  }
  func.func @transform_0(%arg0: i32) -> (i32, i32) {
    %c0_i32 = arith.constant 0 : i32
    %c0_i32_0 = arith.constant 0 : i32
    return %arg0, %c0_i32 : i32, i32
  }
  func.func @transform_1(%arg0: i32) -> (i32, i32) {
    %c0_i32 = arith.constant 0 : i32
    %c0_i32_0 = arith.constant 0 : i32
    return %arg0, %c0_i32 : i32, i32
  }
}

</mosaic_0001>

<llo_original>
// kernel: tpu_custom_call.1
$region0: #{tpu_custom_call.1}
  #allocation0 [shape = 'u32[]', space=smem, size = 0x4, offset = 0x4, fixed_abs, tag = 'smem constant byte address 0x4 - core index']
  #allocation1 [shape = 'u32[144,128]{1,0:T(1,128)}', space=vmem, size = 0x12000, scoped, tag = 'internal scratch']
  %s0 = inlined_call_operand.hbm [shape: f32[4,512], index: 0, kind: input, shape index: {}]
  %s1 = inlined_call_operand.hbm [shape: f32[4,512], index: 1, kind: output, shape index: {}]
  %s2 = sld [smem:[#allocation0]]
  $region18: #{tpu_custom_call.1} parent=0
    _
  %s4 = ssub.s32 1, %s2
  %s5 = scalar_select 0, %s4, %s2
  $region1: #{tpu_custom_call.1} parent=0
    #allocation2 [shape = 'u8[8192]{0}', space=vmem, size = 0x2000, scoped, tag = 'input window, operand 0, single buffered']
    #allocation3 [shape = 's32[1]{0}', space=sflag, size = 0x4, scoped, tag = 'scoped memory for tpu_custom_call.1']
    #allocation4 [shape = 's32[1]{0}', space=sflag, size = 0x4, scoped, tag = 'scoped memory for tpu_custom_call.1']
    #allocation5 [shape = 'u8[8192]{0}', space=vmem, size = 0x2000, scoped, tag = 'output window, operand 0, single buffered']
    %6 = vsyncpa [#allocation3], 0
    %7 = vsyncpa [#allocation4], 0
    // Predicated region
    $region2: #{tpu_custom_call.1} parent=1 // pred_check
      _
    $region3: #{tpu_custom_call.1} parent=1 // pred_check_branch
      %9 = sbr.rel (0) target = $region5
    $region4: #{tpu_custom_call.1} parent=1 // pred_region
      %s11 = ssub.s32 256, 256
      %12 = vsyncadd [#allocation3], %s11
      %s14 = sshll.u32 [#allocation2], 4
      %s15 = int_to_ptr.vmem [resolvable:$true] %s14
      %17 = dma.hbm_to_vmem [thread:$0]  %s0, 256, %s15, [#allocation3]
    $region5: #{tpu_custom_call.1} parent=1 // pred_fallthru
      _
    // Predicated region
    $region6: #{tpu_custom_call.1} parent=1 // pred_check
      _
    $region7: #{tpu_custom_call.1} parent=1 // pred_check_branch
      %19 = sbr.rel (0) target = $region9
    $region8: #{tpu_custom_call.1} parent=1 // pred_region
      %20 = dma.done [#allocation3], 256
    $region9: #{tpu_custom_call.1} parent=1 // pred_fallthru
      _
    %v21 = vld [vmem:[#allocation2] sm:$0xff]
    %v22 = vld [vmem:[#allocation2 + $0x8] sm:$0xff]
    %23 = vst [vmem:[#allocation5] sm:$0xff] %v21
    %24 = vst [vmem:[#allocation5 + $0x8] sm:$0xff] %v22
    // Predicated region
    $region10: #{tpu_custom_call.1} parent=1 // pred_check
      _
    $region11: #{tpu_custom_call.1} parent=1 // pred_check_branch
      %26 = sbr.rel (0) target = $region13
    $region12: #{tpu_custom_call.1} parent=1 // pred_region
      %s28 = ssub.s32 256, 256
      %29 = vsyncadd [#allocation4], %s28
      %s31 = sshll.u32 [#allocation5], 4
      %s32 = int_to_ptr.vmem [resolvable:$true] %s31
      %34 = dma.vmem_to_hbm [thread:$0]  %s32, 256, %s1, [#allocation4]
    $region13: #{tpu_custom_call.1} parent=1 // pred_fallthru
      _
    // Predicated region
    $region14: #{tpu_custom_call.1} parent=1 // pred_check
      _
    $region15: #{tpu_custom_call.1} parent=1 // pred_check_branch
      %36 = sbr.rel (0) target = $region17
    $region16: #{tpu_custom_call.1} parent=1 // pred_region
      %37 = dma.done [#allocation4], 256
    $region17: #{tpu_custom_call.1} parent=1 // pred_fallthru
      _
    %38 = vsyncpa [#allocation3], 1
    %39 = vsyncpa [#allocation4], 1

</llo_original>
